<compile_context>
chip_gen: v5e
topology: v5e:2x2
jax: 0.10.0
libtpu: 0.0.40
codegen_flags: <defaults>
</compile_context>

<pallas_src>
import functools

import jax
import jax.numpy as jnp
from jax import lax
from jax.experimental import pallas as pl
from jax.experimental.pallas import tpu as pltpu


# --------------------------------------------------------------------------
# Kernel
# --------------------------------------------------------------------------
def _iwt_kernel(x_ref, o_ref, *, w, wp):
    """x_ref: (1, 4, TN, W)  - the four wavelet bands of TN fused rows.
       o_ref: (1, TN, 4W)    - [even_row(2W) | odd_row(2W)] per fused row,
                               i.e. exactly the final (..., 2H, 2W) layout."""
    x1 = x_ref[0, 0].astype(jnp.float32)
    x2 = x_ref[0, 1].astype(jnp.float32)
    x3 = x_ref[0, 2].astype(jnp.float32)
    x4 = x_ref[0, 3].astype(jnp.float32)

    d12 = x1 - x2
    s12 = x1 + x2
    d34 = x3 - x4
    s34 = x3 + x4

    c00 = d12 - d34   # even row, even col
    c01 = s12 - s34   # even row, odd  col
    c10 = d12 + d34   # odd  row, even col
    c11 = s12 + s34   # odd  row, odd  col

    if wp != w:
        # Non-power-of-two W: pad each phase to the next power of two so the
        # butterfly below stays valid; the padded tail is dropped at the end.
        pad = jnp.zeros(c00.shape[:-1] + (wp - w,), jnp.float32)
        c00, c01, c10, c11 = [jnp.concatenate([c, pad], axis=-1)
                              for c in (c00, c01, c10, c11)]

    # Lane layout of z: [c00 | c01 | c10 | c11], each wp wide.
    z = jnp.concatenate([c00, c01, c10, c11], axis=-1)     # (TN, 4*wp)

    # Perfect-shuffle butterfly, run simultaneously on both 2*wp halves:
    # result is [riffle(c00, c01) | riffle(c10, c11)] = [even_row | odd_row].
    # At level g, quarters 1 and 2 of every 4g-aligned lane block swap.
    # pltpu.roll (XLU lane rotate, jnp.roll semantics) supplies the +-g values;
    # blocks never straddle the half boundary, so one global butterfly works.
    if wp > 1:
        n = 4 * wp
        lane = lax.broadcasted_iota(jnp.int32, (1, n), 1)   # built once
        g = wp // 2
        while g >= 1:
            s = g.bit_length() - 1
            quarter = (lane >> s) & 3
            take_hi = quarter == 1                    # wants value from lane i + g
            take_lo = quarter == 2                    # wants value from lane i - g
            from_hi = pltpu.roll(z, n - g, axis=1)    # == jnp.roll(z, -g)
            from_lo = pltpu.roll(z, g, axis=1)        # == jnp.roll(z, +g)
            z = jnp.where(take_hi, from_hi, jnp.where(take_lo, from_lo, z))
            g //= 2

    if wp != w:   # drop the padded tail of each half
        z = jnp.concatenate([z[:, : 2 * w], z[:, 2 * wp: 2 * wp + 2 * w]], axis=-1)

    o_ref[0] = z


# --------------------------------------------------------------------------
# Wrapper
# --------------------------------------------------------------------------
def _vmem_capacity_bytes():
    try:
        info = pltpu.get_tpu_info()
        cap = getattr(info, "vmem_capacity_bytes", None)
        if cap:
            return int(cap)
    except Exception:
        pass
    return 64 * 1024 * 1024   # unknown -> assume the smallest (v7x) VMEM


def _choose_tn(nr, w, band_block_bytes, batch):
    """Rows of the fused (outC*color*H) axis per grid step.

    Prefers: (a) a multiple of 8 (layout constraint) that divides nr exactly
    (no partial last block), (b) an even total step count (v7x core split),
    (c) ~band_block_bytes of f32 per band per step.
    """
    target = max(8, band_block_bytes // (4 * w))
    if nr <= target:
        # Whole fused axis in one block; if there is only one batch, still try
        # to give the second TensorCore (v7x) something to do.
        if batch == 1 and nr % 16 == 0 and nr >= 16:
            return nr // 2
        return nr
    cap = max(8, (target // 8) * 8)
    best_any = None
    d = cap
    while d >= 8:
        if nr % d == 0:
            if best_any is None:
                best_any = d
            if (batch * (nr // d)) % 2 == 0:
                return d            # exact divisor + even step count
        d -= 8
    if best_any is not None:
        return best_any             # exact divisor, odd step count
    return cap                      # partial last block (masked by Pallas)


def _iwt_impl(x, *, band_block_bytes=None):
    B, C, color, H, W = x.shape
    assert C % 4 == 0, "channel dim must be divisible by 4"
    outC = C // 4
    Nr = outC * color * H                               # fused row axis
    Wp = 1 if W <= 1 else 1 << (W - 1).bit_length()      # next pow2 >= W

    vmem_cap = _vmem_capacity_bytes()
    if vmem_cap >= 96 * 1024 * 1024:     # v5e / v6e: 128 MiB physical VMEM
        default_band_bytes = 1024 * 1024
        vmem_limit = 64 * 1024 * 1024
    else:                                 # v7x (64 MiB VMEM) or unknown
        default_band_bytes = 512 * 1024
        vmem_limit = 40 * 1024 * 1024
    if band_block_bytes is None:
        band_block_bytes = default_band_bytes

    TN = _choose_tn(Nr, W, band_block_bytes, B)
    ntiles = -(-Nr // TN)
    grid = (B, ntiles)

    # Free, contiguous views (no data movement):
    #   input : (B, 4, Nr, W)  -- band axis split out of C (band is the high
    #                             part of the channel index, matching x[:, k*outC:(k+1)*outC])
    #   output: (B, Nr, 4W) == (B, outC, color, 2H, 2W)
    xv = x.reshape(B, 4, Nr, W)

    out = pl.pallas_call(
        functools.partial(_iwt_kernel, w=W, wp=Wp),
        out_shape=jax.ShapeDtypeStruct((B, Nr, 4 * W), jnp.float32),
        grid=grid,
        in_specs=[pl.BlockSpec((1, 4, TN, W), lambda b, n: (b, 0, n, 0))],
        out_specs=pl.BlockSpec((1, TN, 4 * W), lambda b, n: (b, n, 0)),
        compiler_params=pltpu.CompilerParams(
            dimension_semantics=("parallel", "parallel"),
            vmem_limit_bytes=vmem_limit,
        ),
    )(xv)

    return out.reshape(B, outC, color, 2 * H, 2 * W)


iwt = jax.jit(_iwt_impl, static_argnames=("band_block_bytes",))


def iwt_forward(x, device=None):
    """Matches IWT.forward(x, device); `device` is a no-op in JAX."""
    return iwt(x)


# --------------------------------------------------------------------------
# Pure-JAX reference (matches the PyTorch iwt_init exactly)
# --------------------------------------------------------------------------
def iwt_ref(x):
    B, C, color, H, W = x.shape
    outC = C // 4
    x1 = x[:, 0:outC].astype(jnp.float32)
    x2 = x[:, outC:2 * outC].astype(jnp.float32)
    x3 = x[:, 2 * outC:3 * outC].astype(jnp.float32)
    x4 = x[:, 3 * outC:4 * outC].astype(jnp.float32)
    h = jnp.zeros((B, outC, color, 2 * H, 2 * W), jnp.float32)
    h = h.at[..., 0::2, 0::2].set(x1 - x2 - x3 + x4)
    h = h.at[..., 1::2, 0::2].set(x1 - x2 + x3 - x4)
    h = h.at[..., 0::2, 1::2].set(x1 + x2 - x3 - x4)
    h = h.at[..., 1::2, 1::2].set(x1 + x2 + x3 + x4)
    return h


if __name__ == "__main__":
    k1, k2 = jax.random.split(jax.random.PRNGKey(0))

    # 1) Primary: B=2, C=8 (-> outC=2), color=3, H=W=16 -> output (2, 2, 3, 32, 32)
    x = jax.random.normal(k1, (2, 8, 3, 16, 16), dtype=jnp.float32)
    out = jax.block_until_ready(iwt(x))
    ref = iwt_ref(x)
    assert out.shape == (2, 2, 3, 32, 32), out.shape
    assert out.dtype == jnp.float32, out.dtype
    assert jnp.allclose(out, ref, atol=1e-5, rtol=1e-5), "mismatch (pow2 W)"

    # 2) Same data through the multi-tile path (forces TN=8, 24 grid steps).
    out_t = jax.block_until_ready(iwt(x, band_block_bytes=512))
    assert jnp.allclose(out_t, ref, atol=1e-5, rtol=1e-5), "mismatch (tiled path)"

    # 3) Non-power-of-two spatial dims (review correctness concern): W=7, H=5.
    x2 = jax.random.normal(k2, (1, 4, 3, 5, 7), dtype=jnp.float32)
    out2 = jax.block_until_ready(iwt(x2))
    ref2 = iwt_ref(x2)
    assert out2.shape == (1, 1, 3, 10, 14), out2.shape
    assert jnp.allclose(out2, ref2, atol=1e-5, rtol=1e-5), "mismatch (non-pow2 W)"

    print("KERNEL_OK")
</pallas_src>

<mosaic_0001>
module attributes {stable_mosaic.version = 11 : i64} {
  func.func @_iwt_kernel(%arg0: i32, %arg1: i32, %arg2: memref<1x4x96x16xf32, #tpu.memory_space<vmem>>, %arg3: memref<1x96x64xf32, #tpu.memory_space<vmem>>) attributes {dimension_semantics = [#tpu.dimension_semantics<parallel>, #tpu.dimension_semantics<parallel>], iteration_bounds = array<i64: 2, 1>, scalar_prefetch = 0 : i64, scratch_operands = 0 : i64, tpu.core_type = #tpu.core_type<tc>, window_params = [{transform_indices = @transform_0, window_bounds = array<i64: 1, 4, 96, 16>}, {transform_indices = @transform_1, window_bounds = array<i64: 1, 96, 64>}]} {
    %c0 = arith.constant 0 : index
    %c0_0 = arith.constant 0 : index
    %c0_1 = arith.constant 0 : index
    %c0_2 = arith.constant 0 : index
    %0 = vector.load %arg2[%c0, %c0_0, %c0_1, %c0_2] : memref<1x4x96x16xf32, #tpu.memory_space<vmem>>, vector<1x1x96x16xf32>
    %1 = vector.shape_cast %0 : vector<1x1x96x16xf32> to vector<96x16xf32>
    %c0_3 = arith.constant 0 : index
    %c1 = arith.constant 1 : index
    %c0_4 = arith.constant 0 : index
    %c0_5 = arith.constant 0 : index
    %2 = vector.load %arg2[%c0_3, %c1, %c0_4, %c0_5] : memref<1x4x96x16xf32, #tpu.memory_space<vmem>>, vector<1x1x96x16xf32>
    %3 = vector.shape_cast %2 : vector<1x1x96x16xf32> to vector<96x16xf32>
    %c0_6 = arith.constant 0 : index
    %c2 = arith.constant 2 : index
    %c0_7 = arith.constant 0 : index
    %c0_8 = arith.constant 0 : index
    %4 = vector.load %arg2[%c0_6, %c2, %c0_7, %c0_8] : memref<1x4x96x16xf32, #tpu.memory_space<vmem>>, vector<1x1x96x16xf32>
    %5 = vector.shape_cast %4 : vector<1x1x96x16xf32> to vector<96x16xf32>
    %c0_9 = arith.constant 0 : index
    %c3 = arith.constant 3 : index
    %c0_10 = arith.constant 0 : index
    %c0_11 = arith.constant 0 : index
    %6 = vector.load %arg2[%c0_9, %c3, %c0_10, %c0_11] : memref<1x4x96x16xf32, #tpu.memory_space<vmem>>, vector<1x1x96x16xf32>
    %7 = vector.shape_cast %6 : vector<1x1x96x16xf32> to vector<96x16xf32>
    %8 = arith.subf %1, %3 : vector<96x16xf32>
    %9 = arith.addf %1, %3 : vector<96x16xf32>
    %10 = arith.subf %5, %7 : vector<96x16xf32>
    %11 = arith.addf %5, %7 : vector<96x16xf32>
    %12 = arith.subf %8, %10 : vector<96x16xf32>
    %13 = arith.subf %9, %11 : vector<96x16xf32>
    %14 = arith.addf %8, %10 : vector<96x16xf32>
    %15 = arith.addf %9, %11 : vector<96x16xf32>
    %16 = tpu.concatenate %12, %13, %14, %15 in 1 : vector<96x16xf32>, vector<96x16xf32>, vector<96x16xf32>, vector<96x16xf32> -> vector<96x64xf32>
    %17 = tpu.iota {dimensions = array<i32: 1>} : vector<1x64xi32>
    %c3_i32 = arith.constant 3 : i32
    %18 = vector.broadcast %c3_i32 : i32 to vector<1x64xi32>
    %19 = arith.shrsi %17, %18 : vector<1x64xi32>
    %c3_i32_12 = arith.constant 3 : i32
    %20 = vector.broadcast %c3_i32_12 : i32 to vector<1x64xi32>
    %21 = arith.andi %19, %20 : vector<1x64xi32>
    %c1_i32 = arith.constant 1 : i32
    %22 = vector.broadcast %c1_i32 : i32 to vector<1x64xi32>
    %23 = arith.cmpi eq, %21, %22 : vector<1x64xi32>
    %c2_i32 = arith.constant 2 : i32
    %24 = vector.broadcast %c2_i32 : i32 to vector<1x64xi32>
    %25 = arith.cmpi eq, %21, %24 : vector<1x64xi32>
    %c56_i32 = arith.constant 56 : i32
    %26 = tpu.dynamic_rotate %16 by %c56_i32 dim 1 : vector<96x64xf32>, i32 -> vector<96x64xf32>
    %c8_i32 = arith.constant 8 : i32
    %27 = tpu.dynamic_rotate %16 by %c8_i32 dim 1 : vector<96x64xf32>, i32 -> vector<96x64xf32>
    %28 = vector.shape_cast %25 : vector<1x64xi1> to vector<1x64xi1>
    %29 = vector.broadcast %28 : vector<1x64xi1> to vector<96x64xi1>
    %30 = arith.select %29, %27, %16 : vector<96x64xi1>, vector<96x64xf32>
    %31 = vector.shape_cast %23 : vector<1x64xi1> to vector<1x64xi1>
    %32 = vector.broadcast %31 : vector<1x64xi1> to vector<96x64xi1>
    %33 = arith.select %32, %26, %30 : vector<96x64xi1>, vector<96x64xf32>
    %c2_i32_13 = arith.constant 2 : i32
    %34 = vector.broadcast %c2_i32_13 : i32 to vector<1x64xi32>
    %35 = arith.shrsi %17, %34 : vector<1x64xi32>
    %c3_i32_14 = arith.constant 3 : i32
    %36 = vector.broadcast %c3_i32_14 : i32 to vector<1x64xi32>
    %37 = arith.andi %35, %36 : vector<1x64xi32>
    %c1_i32_15 = arith.constant 1 : i32
    %38 = vector.broadcast %c1_i32_15 : i32 to vector<1x64xi32>
    %39 = arith.cmpi eq, %37, %38 : vector<1x64xi32>
    %c2_i32_16 = arith.constant 2 : i32
    %40 = vector.broadcast %c2_i32_16 : i32 to vector<1x64xi32>
    %41 = arith.cmpi eq, %37, %40 : vector<1x64xi32>
    %c60_i32 = arith.constant 60 : i32
    %42 = tpu.dynamic_rotate %33 by %c60_i32 dim 1 : vector<96x64xf32>, i32 -> vector<96x64xf32>
    %c4_i32 = arith.constant 4 : i32
    %43 = tpu.dynamic_rotate %33 by %c4_i32 dim 1 : vector<96x64xf32>, i32 -> vector<96x64xf32>
    %44 = vector.shape_cast %41 : vector<1x64xi1> to vector<1x64xi1>
    %45 = vector.broadcast %44 : vector<1x64xi1> to vector<96x64xi1>
    %46 = arith.select %45, %43, %33 : vector<96x64xi1>, vector<96x64xf32>
    %47 = vector.shape_cast %39 : vector<1x64xi1> to vector<1x64xi1>
    %48 = vector.broadcast %47 : vector<1x64xi1> to vector<96x64xi1>
    %49 = arith.select %48, %42, %46 : vector<96x64xi1>, vector<96x64xf32>
    %c1_i32_17 = arith.constant 1 : i32
    %50 = vector.broadcast %c1_i32_17 : i32 to vector<1x64xi32>
    %51 = arith.shrsi %17, %50 : vector<1x64xi32>
    %c3_i32_18 = arith.constant 3 : i32
    %52 = vector.broadcast %c3_i32_18 : i32 to vector<1x64xi32>
    %53 = arith.andi %51, %52 : vector<1x64xi32>
    %c1_i32_19 = arith.constant 1 : i32
    %54 = vector.broadcast %c1_i32_19 : i32 to vector<1x64xi32>
    %55 = arith.cmpi eq, %53, %54 : vector<1x64xi32>
    %c2_i32_20 = arith.constant 2 : i32
    %56 = vector.broadcast %c2_i32_20 : i32 to vector<1x64xi32>
    %57 = arith.cmpi eq, %53, %56 : vector<1x64xi32>
    %c62_i32 = arith.constant 62 : i32
    %58 = tpu.dynamic_rotate %49 by %c62_i32 dim 1 : vector<96x64xf32>, i32 -> vector<96x64xf32>
    %c2_i32_21 = arith.constant 2 : i32
    %59 = tpu.dynamic_rotate %49 by %c2_i32_21 dim 1 : vector<96x64xf32>, i32 -> vector<96x64xf32>
    %60 = vector.shape_cast %57 : vector<1x64xi1> to vector<1x64xi1>
    %61 = vector.broadcast %60 : vector<1x64xi1> to vector<96x64xi1>
    %62 = arith.select %61, %59, %49 : vector<96x64xi1>, vector<96x64xf32>
    %63 = vector.shape_cast %55 : vector<1x64xi1> to vector<1x64xi1>
    %64 = vector.broadcast %63 : vector<1x64xi1> to vector<96x64xi1>
    %65 = arith.select %64, %58, %62 : vector<96x64xi1>, vector<96x64xf32>
    %c0_i32 = arith.constant 0 : i32
    %66 = vector.broadcast %c0_i32 : i32 to vector<1x64xi32>
    %67 = arith.shrsi %17, %66 : vector<1x64xi32>
    %c3_i32_22 = arith.constant 3 : i32
    %68 = vector.broadcast %c3_i32_22 : i32 to vector<1x64xi32>
    %69 = arith.andi %67, %68 : vector<1x64xi32>
    %c1_i32_23 = arith.constant 1 : i32
    %70 = vector.broadcast %c1_i32_23 : i32 to vector<1x64xi32>
    %71 = arith.cmpi eq, %69, %70 : vector<1x64xi32>
    %c2_i32_24 = arith.constant 2 : i32
    %72 = vector.broadcast %c2_i32_24 : i32 to vector<1x64xi32>
    %73 = arith.cmpi eq, %69, %72 : vector<1x64xi32>
    %c63_i32 = arith.constant 63 : i32
    %74 = tpu.dynamic_rotate %65 by %c63_i32 dim 1 : vector<96x64xf32>, i32 -> vector<96x64xf32>
    %c1_i32_25 = arith.constant 1 : i32
    %75 = tpu.dynamic_rotate %65 by %c1_i32_25 dim 1 : vector<96x64xf32>, i32 -> vector<96x64xf32>
    %76 = vector.shape_cast %73 : vector<1x64xi1> to vector<1x64xi1>
    %77 = vector.broadcast %76 : vector<1x64xi1> to vector<96x64xi1>
    %78 = arith.select %77, %75, %65 : vector<96x64xi1>, vector<96x64xf32>
    %79 = vector.shape_cast %71 : vector<1x64xi1> to vector<1x64xi1>
    %80 = vector.broadcast %79 : vector<1x64xi1> to vector<96x64xi1>
    %81 = arith.select %80, %74, %78 : vector<96x64xi1>, vector<96x64xf32>
    %c0_26 = arith.constant 0 : index
    %c0_27 = arith.constant 0 : index
    %c0_28 = arith.constant 0 : index
    %82 = vector.load %arg3[%c0_26, %c0_27, %c0_28] : memref<1x96x64xf32, #tpu.memory_space<vmem>>, vector<1x96x64xf32>
    %83 = vector.shape_cast %82 : vector<1x96x64xf32> to vector<96x64xf32>
    %84 = vector.shape_cast %81 : vector<96x64xf32> to vector<1x96x64xf32>
    tpu.vector_store %arg3[%c0_26, %c0_27, %c0_28], %84 {strides = array<i32>} : memref<1x96x64xf32, #tpu.memory_space<vmem>>, vector<1x96x64xf32>,
    return
  }
  func.func @transform_0(%arg0: i32, %arg1: i32) -> (i32, i32, i32, i32) {
    %c0_i32 = arith.constant 0 : i32
    %c0_i32_0 = arith.constant 0 : i32
    %c0_i32_1 = arith.constant 0 : i32
    return %arg0, %c0_i32, %arg1, %c0_i32_0 : i32, i32, i32, i32
  }
  func.func @transform_1(%arg0: i32, %arg1: i32) -> (i32, i32, i32) {
    %c0_i32 = arith.constant 0 : i32
    %c0_i32_0 = arith.constant 0 : i32
    return %arg0, %arg1, %c0_i32 : i32, i32, i32
  }
}

</mosaic_0001>

<llo_original>
// kernel: _iwt_impl.1
$region0: #{_iwt_impl.1}
  #allocation0 [shape = 'u32[]', space=smem, size = 0x4, offset = 0x4, fixed_abs, tag = 'smem constant byte address 0x4 - core index']
  #allocation1 [shape = 'u32[72,128]{1,0:T(1,128)}', space=vmem, size = 0x9000, scoped, tag = 'internal scratch']
  %s0 = inlined_call_operand.hbm [shape: f32[2,4,96,16], index: 0, kind: input, shape index: {}]
  %s1 = inlined_call_operand.vmem [shape: f32[2,96,64], index: 1, kind: output, shape index: {}]
  %s2 = sld [smem:[#allocation0]]
  $region41: #{_iwt_impl.1} parent=0
    _
  %s4 = ssub.s32 1, %s2
  %s5 = scalar_select 0, %s4, %s2
  $region1: #{_iwt_impl.1} parent=0
    #allocation2 [shape = 'u8[393216]{0}', space=vmem, size = 0x60000, scoped, tag = 'input window, operand 0']
    #allocation3 [shape = 's32[2]{0}', space=sflag, size = 0x8, scoped, tag = 'scoped memory for _iwt_impl.1']
    %6 = vsyncpa [#allocation3], 0
    %s7 = scalar_lea.sflag [#allocation3], 1
    %8 = vsyncpa %s7, 0
    loop: start=0, step=1, limit=4
    $region2: #{_iwt_impl.1} parent=1 // loop_pre_header
      _
    $region3: #{_iwt_impl.1} parent=1 // loop_header
      %s10 = sphi 0, %s14
      %p11 = scmp.ge.s32.totalorder %s10, 4
      %s17 = sphi 0, %s29
      %s18 = sphi 0, %s25
      %s19 = sphi 0, %s17
      %s20 = sphi 0, %s18
      %s21 = sphi 0, %s19
      %s22 = sphi 0, %s20
      %s34 = sphi 0, %s36
      %s37 = sphi 0, %s34
      %s38 = sphi 0, %s37
      %s54 = sphi 0, %s38
      %s62 = sphi 0, %s64
      %s65 = sphi 0, %s62
      %s66 = sphi 0, %s65
      %s82 = sphi 0, %s66
    $region4: #{_iwt_impl.1} parent=1 // loop_header_branch
      %13 = sbr.rel (%p11) target = $region8
    $region5: #{_iwt_impl.1} parent=1 // loop_body
      %s15 = ssub.s32 %s10, 1
      %s16 = ssub.s32 %s10, 2
      %s23 = sadd.s32 1, %s18
      %p24 = scmp.ge.s32.totalorder %s23, 1
      %s25 = scalar_select %p24, 0, %s23
      %s26 = sadd.s32 1, %s17
      %s27 = scalar_select %p24, %s26, %s17
      %p28 = scmp.ge.s32.totalorder %s27, 2
      %s29 = scalar_select %p28, 0, %s27
      %s30 = ssub.s32 %s17, %s29
      %s31 = ssub.s32 %s18, %s25
      %s32 = sor.u32 %s30, %s31
      %p33 = scmp.eq.s32.totalorder %s32, 0
      %s35 = sadd.s32 %s34, 1
      %s36 = scalar_select %p33, %s34, %s35
      %p39 = pneg %p33
      %p40 = scmp.eq.s32.totalorder %s10, 1
      %p41 = por %p39, %p40
      %p42 = scmp.ne.s32.totalorder %s34, %s37
      %p43 = scmp.eq.s32.totalorder %s10, 0
      %p44 = por %p42, %p43
      %p45 = scmp.ne.s32.totalorder %s34, %s37
      %p46 = scmp.eq.s32.totalorder %s15, 1
      %p47 = por %p45, %p46
      %p48 = scmp.ne.s32.totalorder %s37, %s38
      %p49 = scmp.eq.s32.totalorder %s15, 0
      %p50 = por %p48, %p49
      %p51 = scmp.ne.s32.totalorder %s37, %s38
      %p52 = scmp.eq.s32.totalorder %s16, 1
      %p53 = por %p51, %p52
      %p55 = scmp.ne.s32.totalorder %s38, %s54
      %p56 = scmp.eq.s32.totalorder %s16, 0
      %p57 = por %p55, %p56
      %s58 = ssub.s32 %s17, %s29
      %s59 = ssub.s32 %s18, %s25
      %s60 = sor.u32 %s58, %s59
      %p61 = scmp.eq.s32.totalorder %s60, 0
      %s63 = sadd.s32 %s62, 1
      %s64 = scalar_select %p61, %s62, %s63
      %p67 = pneg %p61
      %p68 = scmp.eq.s32.totalorder %s10, 1
      %p69 = por %p67, %p68
      %p70 = scmp.ne.s32.totalorder %s62, %s65
      %p71 = scmp.eq.s32.totalorder %s10, 0
      %p72 = por %p70, %p71
      %p73 = scmp.ne.s32.totalorder %s62, %s65
      %p74 = scmp.eq.s32.totalorder %s15, 1
      %p75 = por %p73, %p74
      %p76 = scmp.ne.s32.totalorder %s65, %s66
      %p77 = scmp.eq.s32.totalorder %s15, 0
      %p78 = por %p76, %p77
      %p79 = scmp.ne.s32.totalorder %s65, %s66
      %p80 = scmp.eq.s32.totalorder %s16, 1
      %p81 = por %p79, %p80
      %p83 = scmp.ne.s32.totalorder %s66, %s82
      %p84 = scmp.eq.s32.totalorder %s16, 0
      %p85 = por %p83, %p84
      %p86 = scmp.le.s32.totalorder 1, %s10
      %p87 = scmp.lt.s32.totalorder %s10, 3
      %p88 = pnand %p86, %p87
      %p89 = pneg %p88
      // Predicated region
      $region9: #{_iwt_impl.1} parent=5 // pred_check
        _
      $region10: #{_iwt_impl.1} parent=5 // pred_check_branch
        %91 = sbr.rel (%p88) target = $region12
      $region11: #{_iwt_impl.1} parent=5 // pred_region
        %s92 = ssub.s32 %s10, 1
      $region12: #{_iwt_impl.1} parent=5 // pred_fallthru
        _
      %p93 = scmp.lt.s32.totalorder %s10, 2
      // Predicated region
      $region13: #{_iwt_impl.1} parent=5 // pred_check
        %p94 = pneg %p93
      $region14: #{_iwt_impl.1} parent=5 // pred_check_branch
        %96 = sbr.rel (%p94) target = $region16
      $region15: #{_iwt_impl.1} parent=5 // pred_region
        // Predicated region
        $region17: #{_iwt_impl.1} parent=15 // pred_check
          %p97 = pneg %p44
        $region18: #{_iwt_impl.1} parent=15 // pred_check_branch
          %99 = sbr.rel (%p97) target = $region20
        $region19: #{_iwt_impl.1} parent=15 // pred_region
          %s100 = sand.u32 %s34, 1
          %s101 = scalar_lea.sflag [#allocation3], %s100
          %s102 = sand.u32 %s34, 1
          %s103 = smul.addr %s102, 384
          %s104 = scalar_lea.vmem [#allocation2], %s103
          %s105 = smul.u32 12, %s18
          %107 = vsyncadd %s101, 0
          %s108 = smul.addr %s17, 48
          %s109 = sadd.s32 %s105, %s108
          %s110 = smul.addr %s109, 8
          %s111 = scalar_lea.hbm %s0, %s110
          %s112 = sshll.u32 %s111, 4
          %s113 = int_to_ptr.hbm [resolvable:$true] %s112
          %s114 = sshll.u32 %s104, 4
          %s115 = int_to_ptr.vmem [resolvable:$true] %s114
          %120 = dma.hbm_to_vmem [thread:$0]  %s113, 6144, %s115, %s101, 128, 128, 8
        $region20: #{_iwt_impl.1} parent=15 // pred_fallthru
          _
      $region16: #{_iwt_impl.1} parent=5 // pred_fallthru
        _
      %p121 = scmp.le.s32.totalorder 1, %s10
      %p122 = scmp.lt.s32.totalorder %s10, 3
      %p123 = pnand %p121, %p122
      %p124 = pneg %p123
      // Predicated region
      $region21: #{_iwt_impl.1} parent=5 // pred_check
        _
      $region22: #{_iwt_impl.1} parent=5 // pred_check_branch
        %126 = sbr.rel (%p123) target = $region24
      $region23: #{_iwt_impl.1} parent=5 // pred_region
        %s127 = ssub.s32 %s10, 1
        %s128 = sand.u32 %s37, 1
        %s129 = scalar_lea.sflag [#allocation3], %s128
        %s130 = sand.u32 %s37, 1
        %s131 = smul.addr %s130, 384
        %s132 = scalar_lea.vmem [#allocation2], %s131
        // Predicated region
        $region25: #{_iwt_impl.1} parent=23 // pred_check
          %p133 = pneg %p50
        $region26: #{_iwt_impl.1} parent=23 // pred_check_branch
          %135 = sbr.rel (%p133) target = $region28
        $region27: #{_iwt_impl.1} parent=23 // pred_region
          %137 = dma.done %s129, 6144
        $region28: #{_iwt_impl.1} parent=23 // pred_fallthru
          _
        %s138 = sand.u32 %s37, 1
        %s139 = scalar_lea.sflag [#allocation3], %s138
        %s140 = sand.u32 %s37, 1
        %s141 = smul.addr %s140, 384
        %s142 = scalar_lea.vmem [#allocation2], %s141
        %p143 = pneg %p50
        %p144 = pneg %p47
        %p145 = pneg %p78
        %p146 = pneg %p75
        %s147 = smul.u32 12, %s20
        %p148 = scmp.lt.s32.totalorder %s19, 1
        %s149 = scalar_select %p148, %s19, 1
        %p150 = scmp.lt.s32.totalorder %s147, 11
        %s151 = scalar_select %p150, %s147, 11
        %s152 = smul.addr %s149, 12
        %s153 = sadd.s32 %s151, %s152
        %s154 = smul.addr %s153, 8
        %s155 = scalar_lea.vmem %s1, %s154
        %s156 = smul.u32 12, %s20
        %s157 = smul.u32 12, %s20
        %p158 = scmp.lt.s32.totalorder %s19, 1
        %s159 = scalar_select %p158, %s19, 1
        %p160 = scmp.lt.s32.totalorder %s157, 11
        %s161 = scalar_select %p160, %s157, 11
        %s162 = smul.addr %s159, 12
        %s163 = sadd.s32 %s161, %s162
        %s164 = smul.addr %s163, 8
        %s165 = scalar_lea.vmem %s1, %s164
        %s166 = smul.u32 12, %s20
        %v167 = vld [vmem:[%s132] sm:$0xff]
        %v168 = vld [vmem:[%s132 + $0x8] sm:$0xff]
        %v169 = vld [vmem:[%s132 + $0x10] sm:$0xff]
        %v170 = vld [vmem:[%s132 + $0x18] sm:$0xff]
        %v171 = vld [vmem:[%s132 + $0x20] sm:$0xff]
        %v172 = vld [vmem:[%s132 + $0x28] sm:$0xff]
        %v173 = vld [vmem:[%s132 + $0x30] sm:$0xff]
        %v174 = vld [vmem:[%s132 + $0x38] sm:$0xff]
        %v175 = vld [vmem:[%s132 + $0x40] sm:$0xff]
        %v176 = vld [vmem:[%s132 + $0x48] sm:$0xff]
        %v177 = vld [vmem:[%s132 + $0x50] sm:$0xff]
        %v178 = vld [vmem:[%s132 + $0x58] sm:$0xff]
        %s179 = scalar_lea.vmem %s132, 96 [#allocation2]
        %v180 = vld [vmem:[%s179] sm:$0xff]
        %v181 = vld [vmem:[%s179 + $0x8] sm:$0xff]
        %v182 = vld [vmem:[%s179 + $0x10] sm:$0xff]
        %v183 = vld [vmem:[%s179 + $0x18] sm:$0xff]
        %v184 = vld [vmem:[%s179 + $0x20] sm:$0xff]
        %v185 = vld [vmem:[%s179 + $0x28] sm:$0xff]
        %v186 = vld [vmem:[%s179 + $0x30] sm:$0xff]
        %v187 = vld [vmem:[%s179 + $0x38] sm:$0xff]
        %v188 = vld [vmem:[%s179 + $0x40] sm:$0xff]
        %v189 = vld [vmem:[%s179 + $0x48] sm:$0xff]
        %v190 = vld [vmem:[%s179 + $0x50] sm:$0xff]
        %v191 = vld [vmem:[%s179 + $0x58] sm:$0xff]
        %s192 = scalar_lea.vmem %s132, 192 [#allocation2]
        %v193 = vld [vmem:[%s192] sm:$0xff]
        %v194 = vld [vmem:[%s192 + $0x8] sm:$0xff]
        %v195 = vld [vmem:[%s192 + $0x10] sm:$0xff]
        %v196 = vld [vmem:[%s192 + $0x18] sm:$0xff]
        %v197 = vld [vmem:[%s192 + $0x20] sm:$0xff]
        %v198 = vld [vmem:[%s192 + $0x28] sm:$0xff]
        %v199 = vld [vmem:[%s192 + $0x30] sm:$0xff]
        %v200 = vld [vmem:[%s192 + $0x38] sm:$0xff]
        %v201 = vld [vmem:[%s192 + $0x40] sm:$0xff]
        %v202 = vld [vmem:[%s192 + $0x48] sm:$0xff]
        %v203 = vld [vmem:[%s192 + $0x50] sm:$0xff]
        %v204 = vld [vmem:[%s192 + $0x58] sm:$0xff]
        %s205 = scalar_lea.vmem %s132, 288 [#allocation2]
        %v206 = vld [vmem:[%s205] sm:$0xff]
        %v207 = vld [vmem:[%s205 + $0x8] sm:$0xff]
        %v208 = vld [vmem:[%s205 + $0x10] sm:$0xff]
        %v209 = vld [vmem:[%s205 + $0x18] sm:$0xff]
        %v210 = vld [vmem:[%s205 + $0x20] sm:$0xff]
        %v211 = vld [vmem:[%s205 + $0x28] sm:$0xff]
        %v212 = vld [vmem:[%s205 + $0x30] sm:$0xff]
        %v213 = vld [vmem:[%s205 + $0x38] sm:$0xff]
        %v214 = vld [vmem:[%s205 + $0x40] sm:$0xff]
        %v215 = vld [vmem:[%s205 + $0x48] sm:$0xff]
        %v216 = vld [vmem:[%s205 + $0x50] sm:$0xff]
        %v217 = vld [vmem:[%s205 + $0x58] sm:$0xff]
        %v218 = vsub.f32 %v167, %v180
        %v219 = vsub.f32 %v168, %v181
        %v220 = vsub.f32 %v169, %v182
        %v221 = vsub.f32 %v170, %v183
        %v222 = vsub.f32 %v171, %v184
        %v223 = vsub.f32 %v172, %v185
        %v224 = vsub.f32 %v173, %v186
        %v225 = vsub.f32 %v174, %v187
        %v226 = vsub.f32 %v175, %v188
        %v227 = vsub.f32 %v176, %v189
        %v228 = vsub.f32 %v177, %v190
        %v229 = vsub.f32 %v178, %v191
        %v230 = vadd.f32 %v167, %v180
        %v231 = vadd.f32 %v168, %v181
        %v232 = vadd.f32 %v169, %v182
        %v233 = vadd.f32 %v170, %v183
        %v234 = vadd.f32 %v171, %v184
        %v235 = vadd.f32 %v172, %v185
        %v236 = vadd.f32 %v173, %v186
        %v237 = vadd.f32 %v174, %v187
        %v238 = vadd.f32 %v175, %v188
        %v239 = vadd.f32 %v176, %v189
        %v240 = vadd.f32 %v177, %v190
        %v241 = vadd.f32 %v178, %v191
        %v242 = vsub.f32 %v193, %v206
        %v243 = vsub.f32 %v194, %v207
        %v244 = vsub.f32 %v195, %v208
        %v245 = vsub.f32 %v196, %v209
        %v246 = vsub.f32 %v197, %v210
        %v247 = vsub.f32 %v198, %v211
        %v248 = vsub.f32 %v199, %v212
        %v249 = vsub.f32 %v200, %v213
        %v250 = vsub.f32 %v201, %v214
        %v251 = vsub.f32 %v202, %v215
        %v252 = vsub.f32 %v203, %v216
        %v253 = vsub.f32 %v204, %v217
        %v254 = vadd.f32 %v193, %v206
        %v255 = vadd.f32 %v194, %v207
        %v256 = vadd.f32 %v195, %v208
        %v257 = vadd.f32 %v196, %v209
        %v258 = vadd.f32 %v197, %v210
        %v259 = vadd.f32 %v198, %v211
        %v260 = vadd.f32 %v199, %v212
        %v261 = vadd.f32 %v200, %v213
        %v262 = vadd.f32 %v201, %v214
        %v263 = vadd.f32 %v202, %v215
        %v264 = vadd.f32 %v203, %v216
        %v265 = vadd.f32 %v204, %v217
        %v266 = vsub.f32 %v218, %v242
        %v267 = vsub.f32 %v219, %v243
        %v268 = vsub.f32 %v220, %v244
        %v269 = vsub.f32 %v221, %v245
        %v270 = vsub.f32 %v222, %v246
        %v271 = vsub.f32 %v223, %v247
        %v272 = vsub.f32 %v224, %v248
        %v273 = vsub.f32 %v225, %v249
        %v274 = vsub.f32 %v226, %v250
        %v275 = vsub.f32 %v227, %v251
        %v276 = vsub.f32 %v228, %v252
        %v277 = vsub.f32 %v229, %v253
        %v278 = vsub.f32 %v230, %v254
        %v279 = vsub.f32 %v231, %v255
        %v280 = vsub.f32 %v232, %v256
        %v281 = vsub.f32 %v233, %v257
        %v282 = vsub.f32 %v234, %v258
        %v283 = vsub.f32 %v235, %v259
        %v284 = vsub.f32 %v236, %v260
        %v285 = vsub.f32 %v237, %v261
        %v286 = vsub.f32 %v238, %v262
        %v287 = vsub.f32 %v239, %v263
        %v288 = vsub.f32 %v240, %v264
        %v289 = vsub.f32 %v241, %v265
        %v290 = vadd.f32 %v218, %v242
        %v291 = vadd.f32 %v219, %v243
        %v292 = vadd.f32 %v220, %v244
        %v293 = vadd.f32 %v221, %v245
        %v294 = vadd.f32 %v222, %v246
        %v295 = vadd.f32 %v223, %v247
        %v296 = vadd.f32 %v224, %v248
        %v297 = vadd.f32 %v225, %v249
        %v298 = vadd.f32 %v226, %v250
        %v299 = vadd.f32 %v227, %v251
        %v300 = vadd.f32 %v228, %v252
        %v301 = vadd.f32 %v229, %v253
        %v302 = vadd.f32 %v230, %v254
        %v303 = vadd.f32 %v231, %v255
        %v304 = vadd.f32 %v232, %v256
        %v305 = vadd.f32 %v233, %v257
        %v306 = vadd.f32 %v234, %v258
        %v307 = vadd.f32 %v235, %v259
        %v308 = vadd.f32 %v236, %v260
        %v309 = vadd.f32 %v237, %v261
        %v310 = vadd.f32 %v238, %v262
        %v311 = vadd.f32 %v239, %v263
        %v312 = vadd.f32 %v240, %v264
        %v313 = vadd.f32 %v241, %v265
        %326 = vrot.lane.b32.xlu0 %v278, 16
        %v327 = vpop.permute.xlu0 %326
        %328 = vrot.lane.b32.xlu0 %v279, 16
        %v329 = vpop.permute.xlu0 %328
        %330 = vrot.lane.b32.xlu0 %v280, 16
        %v331 = vpop.permute.xlu0 %330
        %332 = vrot.lane.b32.xlu0 %v281, 16
        %v333 = vpop.permute.xlu0 %332
        %334 = vrot.lane.b32.xlu0 %v282, 16
        %v335 = vpop.permute.xlu0 %334
        %336 = vrot.lane.b32.xlu0 %v283, 16
        %v337 = vpop.permute.xlu0 %336
        %338 = vrot.lane.b32.xlu0 %v284, 16
        %v339 = vpop.permute.xlu0 %338
        %340 = vrot.lane.b32.xlu0 %v285, 16
        %v341 = vpop.permute.xlu0 %340
        %342 = vrot.lane.b32.xlu0 %v286, 16
        %v343 = vpop.permute.xlu0 %342
        %344 = vrot.lane.b32.xlu0 %v287, 16
        %v345 = vpop.permute.xlu0 %344
        %346 = vrot.lane.b32.xlu0 %v288, 16
        %v347 = vpop.permute.xlu0 %346
        %348 = vrot.lane.b32.xlu0 %v289, 16
        %v349 = vpop.permute.xlu0 %348
        %374 = vrot.lane.b32.xlu0 %v290, 32
        %v375 = vpop.permute.xlu0 %374
        %376 = vrot.lane.b32.xlu0 %v291, 32
        %v377 = vpop.permute.xlu0 %376
        %378 = vrot.lane.b32.xlu0 %v292, 32
        %v379 = vpop.permute.xlu0 %378
        %380 = vrot.lane.b32.xlu0 %v293, 32
        %v381 = vpop.permute.xlu0 %380
        %382 = vrot.lane.b32.xlu0 %v294, 32
        %v383 = vpop.permute.xlu0 %382
        %384 = vrot.lane.b32.xlu0 %v295, 32
        %v385 = vpop.permute.xlu0 %384
        %386 = vrot.lane.b32.xlu0 %v296, 32
        %v387 = vpop.permute.xlu0 %386
        %388 = vrot.lane.b32.xlu0 %v297, 32
        %v389 = vpop.permute.xlu0 %388
        %390 = vrot.lane.b32.xlu0 %v298, 32
        %v391 = vpop.permute.xlu0 %390
        %392 = vrot.lane.b32.xlu0 %v299, 32
        %v393 = vpop.permute.xlu0 %392
        %394 = vrot.lane.b32.xlu0 %v300, 32
        %v395 = vpop.permute.xlu0 %394
        %396 = vrot.lane.b32.xlu0 %v301, 32
        %v397 = vpop.permute.xlu0 %396
        %422 = vrot.lane.b32.xlu0 %v302, 48
        %v423 = vpop.permute.xlu0 %422
        %424 = vrot.lane.b32.xlu0 %v303, 48
        %v425 = vpop.permute.xlu0 %424
        %426 = vrot.lane.b32.xlu0 %v304, 48
        %v427 = vpop.permute.xlu0 %426
        %428 = vrot.lane.b32.xlu0 %v305, 48
        %v429 = vpop.permute.xlu0 %428
        %430 = vrot.lane.b32.xlu0 %v306, 48
        %v431 = vpop.permute.xlu0 %430
        %432 = vrot.lane.b32.xlu0 %v307, 48
        %v433 = vpop.permute.xlu0 %432
        %434 = vrot.lane.b32.xlu0 %v308, 48
        %v435 = vpop.permute.xlu0 %434
        %436 = vrot.lane.b32.xlu0 %v309, 48
        %v437 = vpop.permute.xlu0 %436
        %438 = vrot.lane.b32.xlu0 %v310, 48
        %v439 = vpop.permute.xlu0 %438
        %440 = vrot.lane.b32.xlu0 %v311, 48
        %v441 = vpop.permute.xlu0 %440
        %442 = vrot.lane.b32.xlu0 %v312, 48
        %v443 = vpop.permute.xlu0 %442
        %444 = vrot.lane.b32.xlu0 %v313, 48
        %v445 = vpop.permute.xlu0 %444
        %vm458 = vcmask 130048
        %v459 = vsel %vm458, %v266, %v327
        %v460 = vsel %vm458, %v267, %v329
        %v461 = vsel %vm458, %v268, %v331
        %v462 = vsel %vm458, %v269, %v333
        %v463 = vsel %vm458, %v270, %v335
        %v464 = vsel %vm458, %v271, %v337
        %v465 = vsel %vm458, %v272, %v339
        %v466 = vsel %vm458, %v273, %v341
        %v467 = vsel %vm458, %v274, %v343
        %v468 = vsel %vm458, %v275, %v345
        %v469 = vsel %vm458, %v276, %v347
        %v470 = vsel %vm458, %v277, %v349
        %vm471 = vcmask 261120
        %v472 = vsel %vm471, %v459, %v375
        %v473 = vsel %vm471, %v460, %v377
        %v474 = vsel %vm471, %v461, %v379
        %v475 = vsel %vm471, %v462, %v381
        %v476 = vsel %vm471, %v463, %v383
        %v477 = vsel %vm471, %v464, %v385
        %v478 = vsel %vm471, %v465, %v387
        %v479 = vsel %vm471, %v466, %v389
        %v480 = vsel %vm471, %v467, %v391
        %v481 = vsel %vm471, %v468, %v393
        %v482 = vsel %vm471, %v469, %v395
        %v483 = vsel %vm471, %v470, %v397
        %vm484 = vcmask 392192
        %v485 = vsel %vm484, %v472, %v423
        %v486 = vsel %vm484, %v473, %v425
        %v487 = vsel %vm484, %v474, %v427
        %v488 = vsel %vm484, %v475, %v429
        %v489 = vsel %vm484, %v476, %v431
        %v490 = vsel %vm484, %v477, %v433
        %v491 = vsel %vm484, %v478, %v435
        %v492 = vsel %vm484, %v479, %v437
        %v493 = vsel %vm484, %v480, %v439
        %v494 = vsel %vm484, %v481, %v441
        %v495 = vsel %vm484, %v482, %v443
        %v496 = vsel %vm484, %v483, %v445
        %v497 = vlaneseq
        %v498 = vand.u32 %v497, 127
        %v499 = vshra.s32 %v498, 3
        %v500 = vand.u32 %v499, 3
        %vm501 = vcmp.eq.s32.totalorder %v500, 1
        %vm502 = vcmp.eq.s32.totalorder %v500, 2
        %vm503 = vcmask 1048064
        %504 = vrot.lane.b32.xlu0 %v485, 64
        %v505 = vpop.permute.xlu0 %504
        %v506 = vsel %vm503, %v505, %v485
        %507 = vrot.lane.b32.xlu0 %v486, 64
        %v508 = vpop.permute.xlu0 %507
        %v509 = vsel %vm503, %v508, %v486
        %510 = vrot.lane.b32.xlu0 %v487, 64
        %v511 = vpop.permute.xlu0 %510
        %v512 = vsel %vm503, %v511, %v487
        %513 = vrot.lane.b32.xlu0 %v488, 64
        %v514 = vpop.permute.xlu0 %513
        %v515 = vsel %vm503, %v514, %v488
        %516 = vrot.lane.b32.xlu0 %v489, 64
        %v517 = vpop.permute.xlu0 %516
        %v518 = vsel %vm503, %v517, %v489
        %519 = vrot.lane.b32.xlu0 %v490, 64
        %v520 = vpop.permute.xlu0 %519
        %v521 = vsel %vm503, %v520, %v490
        %522 = vrot.lane.b32.xlu0 %v491, 64
        %v523 = vpop.permute.xlu0 %522
        %v524 = vsel %vm503, %v523, %v491
        %525 = vrot.lane.b32.xlu0 %v492, 64
        %v526 = vpop.permute.xlu0 %525
        %v527 = vsel %vm503, %v526, %v492
        %528 = vrot.lane.b32.xlu0 %v493, 64
        %v529 = vpop.permute.xlu0 %528
        %v530 = vsel %vm503, %v529, %v493
        %531 = vrot.lane.b32.xlu0 %v494, 64
        %v532 = vpop.permute.xlu0 %531
        %v533 = vsel %vm503, %v532, %v494
        %534 = vrot.lane.b32.xlu0 %v495, 64
        %v535 = vpop.permute.xlu0 %534
        %v536 = vsel %vm503, %v535, %v495
        %537 = vrot.lane.b32.xlu0 %v496, 64
        %v538 = vpop.permute.xlu0 %537
        %v539 = vsel %vm503, %v538, %v496
        %540 = vrot.lane.b32.xlu0 %v506, 64
        %v541 = vpop.permute.xlu0 %540
        %542 = vrot.lane.b32.xlu0 %v509, 64
        %v543 = vpop.permute.xlu0 %542
        %544 = vrot.lane.b32.xlu0 %v512, 64
        %v545 = vpop.permute.xlu0 %544
        %546 = vrot.lane.b32.xlu0 %v515, 64
        %v547 = vpop.permute.xlu0 %546
        %548 = vrot.lane.b32.xlu0 %v518, 64
        %v549 = vpop.permute.xlu0 %548
        %550 = vrot.lane.b32.xlu0 %v521, 64
        %v551 = vpop.permute.xlu0 %550
        %552 = vrot.lane.b32.xlu0 %v524, 64
        %v553 = vpop.permute.xlu0 %552
        %554 = vrot.lane.b32.xlu0 %v527, 64
        %v555 = vpop.permute.xlu0 %554
        %556 = vrot.lane.b32.xlu0 %v530, 64
        %v557 = vpop.permute.xlu0 %556
        %558 = vrot.lane.b32.xlu0 %v533, 64
        %v559 = vpop.permute.xlu0 %558
        %560 = vrot.lane.b32.xlu0 %v536, 64
        %v561 = vpop.permute.xlu0 %560
        %562 = vrot.lane.b32.xlu0 %v539, 64
        %v563 = vpop.permute.xlu0 %562
        %v564 = vsel %vm503, %v541, %v485
        %v565 = vsel %vm503, %v543, %v486
        %v566 = vsel %vm503, %v545, %v487
        %v567 = vsel %vm503, %v547, %v488
        %v568 = vsel %vm503, %v549, %v489
        %v569 = vsel %vm503, %v551, %v490
        %v570 = vsel %vm503, %v553, %v491
        %v571 = vsel %vm503, %v555, %v492
        %v572 = vsel %vm503, %v557, %v493
        %v573 = vsel %vm503, %v559, %v494
        %v574 = vsel %vm503, %v561, %v495
        %v575 = vsel %vm503, %v563, %v496
        %v576 = vsel %vm502, 1, 0
        %vm577 = vcmp.eq.s32.totalorder %v576, 1
        %590 = vrot.lane.b32.xlu0 %v564, 72
        %v591 = vpop.permute.xlu0 %590
        %592 = vrot.lane.b32.xlu0 %v565, 72
        %v593 = vpop.permute.xlu0 %592
        %594 = vrot.lane.b32.xlu0 %v566, 72
        %v595 = vpop.permute.xlu0 %594
        %596 = vrot.lane.b32.xlu0 %v567, 72
        %v597 = vpop.permute.xlu0 %596
        %598 = vrot.lane.b32.xlu0 %v568, 72
        %v599 = vpop.permute.xlu0 %598
        %600 = vrot.lane.b32.xlu0 %v569, 72
        %v601 = vpop.permute.xlu0 %600
        %602 = vrot.lane.b32.xlu0 %v570, 72
        %v603 = vpop.permute.xlu0 %602
        %604 = vrot.lane.b32.xlu0 %v571, 72
        %v605 = vpop.permute.xlu0 %604
        %606 = vrot.lane.b32.xlu0 %v572, 72
        %v607 = vpop.permute.xlu0 %606
        %608 = vrot.lane.b32.xlu0 %v573, 72
        %v609 = vpop.permute.xlu0 %608
        %610 = vrot.lane.b32.xlu0 %v574, 72
        %v611 = vpop.permute.xlu0 %610
        %612 = vrot.lane.b32.xlu0 %v575, 72
        %v613 = vpop.permute.xlu0 %612
        %v626 = vsel %vm577, %v591, %v485
        %v627 = vsel %vm577, %v593, %v486
        %v628 = vsel %vm577, %v595, %v487
        %v629 = vsel %vm577, %v597, %v488
        %v630 = vsel %vm577, %v599, %v489
        %v631 = vsel %vm577, %v601, %v490
        %v632 = vsel %vm577, %v603, %v491
        %v633 = vsel %vm577, %v605, %v492
        %v634 = vsel %vm577, %v607, %v493
        %v635 = vsel %vm577, %v609, %v494
        %v636 = vsel %vm577, %v611, %v495
        %v637 = vsel %vm577, %v613, %v496
        %v638 = vsel %vm501, 1, 0
        %vm639 = vcmp.eq.s32.totalorder %v638, 1
        %640 = vrot.lane.b32.xlu0 %v564, 120
        %v641 = vpop.permute.xlu0 %640
        %642 = vrot.lane.b32.xlu0 %v565, 120
        %v643 = vpop.permute.xlu0 %642
        %644 = vrot.lane.b32.xlu0 %v566, 120
        %v645 = vpop.permute.xlu0 %644
        %646 = vrot.lane.b32.xlu0 %v567, 120
        %v647 = vpop.permute.xlu0 %646
        %648 = vrot.lane.b32.xlu0 %v568, 120
        %v649 = vpop.permute.xlu0 %648
        %650 = vrot.lane.b32.xlu0 %v569, 120
        %v651 = vpop.permute.xlu0 %650
        %652 = vrot.lane.b32.xlu0 %v570, 120
        %v653 = vpop.permute.xlu0 %652
        %654 = vrot.lane.b32.xlu0 %v571, 120
        %v655 = vpop.permute.xlu0 %654
        %656 = vrot.lane.b32.xlu0 %v572, 120
        %v657 = vpop.permute.xlu0 %656
        %658 = vrot.lane.b32.xlu0 %v573, 120
        %v659 = vpop.permute.xlu0 %658
        %660 = vrot.lane.b32.xlu0 %v574, 120
        %v661 = vpop.permute.xlu0 %660
        %662 = vrot.lane.b32.xlu0 %v575, 120
        %v663 = vpop.permute.xlu0 %662
        %v676 = vsel %vm639, %v641, %v626
        %v677 = vsel %vm639, %v643, %v627
        %v678 = vsel %vm639, %v645, %v628
        %v679 = vsel %vm639, %v647, %v629
        %v680 = vsel %vm639, %v649, %v630
        %v681 = vsel %vm639, %v651, %v631
        %v682 = vsel %vm639, %v653, %v632
        %v683 = vsel %vm639, %v655, %v633
        %v684 = vsel %vm639, %v657, %v634
        %v685 = vsel %vm639, %v659, %v635
        %v686 = vsel %vm639, %v661, %v636
        %v687 = vsel %vm639, %v663, %v637
        %v688 = vshra.s32 %v498, 2
        %v689 = vand.u32 %v688, 3
        %vm690 = vcmp.eq.s32.totalorder %v689, 1
        %vm691 = vcmp.eq.s32.totalorder %v689, 2
        %692 = vrot.lane.b32.xlu0 %v676, 64
        %v693 = vpop.permute.xlu0 %692
        %v694 = vsel %vm503, %v693, %v676
        %695 = vrot.lane.b32.xlu0 %v677, 64
        %v696 = vpop.permute.xlu0 %695
        %v697 = vsel %vm503, %v696, %v677
        %698 = vrot.lane.b32.xlu0 %v678, 64
        %v699 = vpop.permute.xlu0 %698
        %v700 = vsel %vm503, %v699, %v678
        %701 = vrot.lane.b32.xlu0 %v679, 64
        %v702 = vpop.permute.xlu0 %701
        %v703 = vsel %vm503, %v702, %v679
        %704 = vrot.lane.b32.xlu0 %v680, 64
        %v705 = vpop.permute.xlu0 %704
        %v706 = vsel %vm503, %v705, %v680
        %707 = vrot.lane.b32.xlu0 %v681, 64
        %v708 = vpop.permute.xlu0 %707
        %v709 = vsel %vm503, %v708, %v681
        %710 = vrot.lane.b32.xlu0 %v682, 64
        %v711 = vpop.permute.xlu0 %710
        %v712 = vsel %vm503, %v711, %v682
        %713 = vrot.lane.b32.xlu0 %v683, 64
        %v714 = vpop.permute.xlu0 %713
        %v715 = vsel %vm503, %v714, %v683
        %716 = vrot.lane.b32.xlu0 %v684, 64
        %v717 = vpop.permute.xlu0 %716
        %v718 = vsel %vm503, %v717, %v684
        %719 = vrot.lane.b32.xlu0 %v685, 64
        %v720 = vpop.permute.xlu0 %719
        %v721 = vsel %vm503, %v720, %v685
        %722 = vrot.lane.b32.xlu0 %v686, 64
        %v723 = vpop.permute.xlu0 %722
        %v724 = vsel %vm503, %v723, %v686
        %725 = vrot.lane.b32.xlu0 %v687, 64
        %v726 = vpop.permute.xlu0 %725
        %v727 = vsel %vm503, %v726, %v687
        %728 = vrot.lane.b32.xlu0 %v694, 64
        %v729 = vpop.permute.xlu0 %728
        %730 = vrot.lane.b32.xlu0 %v697, 64
        %v731 = vpop.permute.xlu0 %730
        %732 = vrot.lane.b32.xlu0 %v700, 64
        %v733 = vpop.permute.xlu0 %732
        %734 = vrot.lane.b32.xlu0 %v703, 64
        %v735 = vpop.permute.xlu0 %734
        %736 = vrot.lane.b32.xlu0 %v706, 64
        %v737 = vpop.permute.xlu0 %736
        %738 = vrot.lane.b32.xlu0 %v709, 64
        %v739 = vpop.permute.xlu0 %738
        %740 = vrot.lane.b32.xlu0 %v712, 64
        %v741 = vpop.permute.xlu0 %740
        %742 = vrot.lane.b32.xlu0 %v715, 64
        %v743 = vpop.permute.xlu0 %742
        %744 = vrot.lane.b32.xlu0 %v718, 64
        %v745 = vpop.permute.xlu0 %744
        %746 = vrot.lane.b32.xlu0 %v721, 64
        %v747 = vpop.permute.xlu0 %746
        %748 = vrot.lane.b32.xlu0 %v724, 64
        %v749 = vpop.permute.xlu0 %748
        %750 = vrot.lane.b32.xlu0 %v727, 64
        %v751 = vpop.permute.xlu0 %750
        %v752 = vsel %vm503, %v729, %v676
        %v753 = vsel %vm503, %v731, %v677
        %v754 = vsel %vm503, %v733, %v678
        %v755 = vsel %vm503, %v735, %v679
        %v756 = vsel %vm503, %v737, %v680
        %v757 = vsel %vm503, %v739, %v681
        %v758 = vsel %vm503, %v741, %v682
        %v759 = vsel %vm503, %v743, %v683
        %v760 = vsel %vm503, %v745, %v684
        %v761 = vsel %vm503, %v747, %v685
        %v762 = vsel %vm503, %v749, %v686
        %v763 = vsel %vm503, %v751, %v687
        %v764 = vsel %vm691, 1, 0
        %vm765 = vcmp.eq.s32.totalorder %v764, 1
        %778 = vrot.lane.b32.xlu0 %v752, 68
        %v779 = vpop.permute.xlu0 %778
        %780 = vrot.lane.b32.xlu0 %v753, 68
        %v781 = vpop.permute.xlu0 %780
        %782 = vrot.lane.b32.xlu0 %v754, 68
        %v783 = vpop.permute.xlu0 %782
        %784 = vrot.lane.b32.xlu0 %v755, 68
        %v785 = vpop.permute.xlu0 %784
        %786 = vrot.lane.b32.xlu0 %v756, 68
        %v787 = vpop.permute.xlu0 %786
        %788 = vrot.lane.b32.xlu0 %v757, 68
        %v789 = vpop.permute.xlu0 %788
        %790 = vrot.lane.b32.xlu0 %v758, 68
        %v791 = vpop.permute.xlu0 %790
        %792 = vrot.lane.b32.xlu0 %v759, 68
        %v793 = vpop.permute.xlu0 %792
        %794 = vrot.lane.b32.xlu0 %v760, 68
        %v795 = vpop.permute.xlu0 %794
        %796 = vrot.lane.b32.xlu0 %v761, 68
        %v797 = vpop.permute.xlu0 %796
        %798 = vrot.lane.b32.xlu0 %v762, 68
        %v799 = vpop.permute.xlu0 %798
        %800 = vrot.lane.b32.xlu0 %v763, 68
        %v801 = vpop.permute.xlu0 %800
        %v814 = vsel %vm765, %v779, %v676
        %v815 = vsel %vm765, %v781, %v677
        %v816 = vsel %vm765, %v783, %v678
        %v817 = vsel %vm765, %v785, %v679
        %v818 = vsel %vm765, %v787, %v680
        %v819 = vsel %vm765, %v789, %v681
        %v820 = vsel %vm765, %v791, %v682
        %v821 = vsel %vm765, %v793, %v683
        %v822 = vsel %vm765, %v795, %v684
        %v823 = vsel %vm765, %v797, %v685
        %v824 = vsel %vm765, %v799, %v686
        %v825 = vsel %vm765, %v801, %v687
        %v826 = vsel %vm690, 1, 0
        %vm827 = vcmp.eq.s32.totalorder %v826, 1
        %828 = vrot.lane.b32.xlu0 %v752, 124
        %v829 = vpop.permute.xlu0 %828
        %830 = vrot.lane.b32.xlu0 %v753, 124
        %v831 = vpop.permute.xlu0 %830
        %832 = vrot.lane.b32.xlu0 %v754, 124
        %v833 = vpop.permute.xlu0 %832
        %834 = vrot.lane.b32.xlu0 %v755, 124
        %v835 = vpop.permute.xlu0 %834
        %836 = vrot.lane.b32.xlu0 %v756, 124
        %v837 = vpop.permute.xlu0 %836
        %838 = vrot.lane.b32.xlu0 %v757, 124
        %v839 = vpop.permute.xlu0 %838
        %840 = vrot.lane.b32.xlu0 %v758, 124
        %v841 = vpop.permute.xlu0 %840
        %842 = vrot.lane.b32.xlu0 %v759, 124
        %v843 = vpop.permute.xlu0 %842
        %844 = vrot.lane.b32.xlu0 %v760, 124
        %v845 = vpop.permute.xlu0 %844
        %846 = vrot.lane.b32.xlu0 %v761, 124
        %v847 = vpop.permute.xlu0 %846
        %848 = vrot.lane.b32.xlu0 %v762, 124
        %v849 = vpop.permute.xlu0 %848
        %850 = vrot.lane.b32.xlu0 %v763, 124
        %v851 = vpop.permute.xlu0 %850
        %v864 = vsel %vm827, %v829, %v814
        %v865 = vsel %vm827, %v831, %v815
        %v866 = vsel %vm827, %v833, %v816
        %v867 = vsel %vm827, %v835, %v817
        %v868 = vsel %vm827, %v837, %v818
        %v869 = vsel %vm827, %v839, %v819
        %v870 = vsel %vm827, %v841, %v820
        %v871 = vsel %vm827, %v843, %v821
        %v872 = vsel %vm827, %v845, %v822
        %v873 = vsel %vm827, %v847, %v823
        %v874 = vsel %vm827, %v849, %v824
        %v875 = vsel %vm827, %v851, %v825
        %v876 = vshra.s32 %v498, 1
        %v877 = vand.u32 %v876, 3
        %vm878 = vcmp.eq.s32.totalorder %v877, 1
        %vm879 = vcmp.eq.s32.totalorder %v877, 2
        %880 = vrot.lane.b32.xlu0 %v864, 64
        %v881 = vpop.permute.xlu0 %880
        %v882 = vsel %vm503, %v881, %v864
        %883 = vrot.lane.b32.xlu0 %v865, 64
        %v884 = vpop.permute.xlu0 %883
        %v885 = vsel %vm503, %v884, %v865
        %886 = vrot.lane.b32.xlu0 %v866, 64
        %v887 = vpop.permute.xlu0 %886
        %v888 = vsel %vm503, %v887, %v866
        %889 = vrot.lane.b32.xlu0 %v867, 64
        %v890 = vpop.permute.xlu0 %889
        %v891 = vsel %vm503, %v890, %v867
        %892 = vrot.lane.b32.xlu0 %v868, 64
        %v893 = vpop.permute.xlu0 %892
        %v894 = vsel %vm503, %v893, %v868
        %895 = vrot.lane.b32.xlu0 %v869, 64
        %v896 = vpop.permute.xlu0 %895
        %v897 = vsel %vm503, %v896, %v869
        %898 = vrot.lane.b32.xlu0 %v870, 64
        %v899 = vpop.permute.xlu0 %898
        %v900 = vsel %vm503, %v899, %v870
        %901 = vrot.lane.b32.xlu0 %v871, 64
        %v902 = vpop.permute.xlu0 %901
        %v903 = vsel %vm503, %v902, %v871
        %904 = vrot.lane.b32.xlu0 %v872, 64
        %v905 = vpop.permute.xlu0 %904
        %v906 = vsel %vm503, %v905, %v872
        %907 = vrot.lane.b32.xlu0 %v873, 64
        %v908 = vpop.permute.xlu0 %907
        %v909 = vsel %vm503, %v908, %v873
        %910 = vrot.lane.b32.xlu0 %v874, 64
        %v911 = vpop.permute.xlu0 %910
        %v912 = vsel %vm503, %v911, %v874
        %913 = vrot.lane.b32.xlu0 %v875, 64
        %v914 = vpop.permute.xlu0 %913
        %v915 = vsel %vm503, %v914, %v875
        %916 = vrot.lane.b32.xlu0 %v882, 64
        %v917 = vpop.permute.xlu0 %916
        %918 = vrot.lane.b32.xlu0 %v885, 64
        %v919 = vpop.permute.xlu0 %918
        %920 = vrot.lane.b32.xlu0 %v888, 64
        %v921 = vpop.permute.xlu0 %920
        %922 = vrot.lane.b32.xlu0 %v891, 64
        %v923 = vpop.permute.xlu0 %922
        %924 = vrot.lane.b32.xlu0 %v894, 64
        %v925 = vpop.permute.xlu0 %924
        %926 = vrot.lane.b32.xlu0 %v897, 64
        %v927 = vpop.permute.xlu0 %926
        %928 = vrot.lane.b32.xlu0 %v900, 64
        %v929 = vpop.permute.xlu0 %928
        %930 = vrot.lane.b32.xlu0 %v903, 64
        %v931 = vpop.permute.xlu0 %930
        %932 = vrot.lane.b32.xlu0 %v906, 64
        %v933 = vpop.permute.xlu0 %932
        %934 = vrot.lane.b32.xlu0 %v909, 64
        %v935 = vpop.permute.xlu0 %934
        %936 = vrot.lane.b32.xlu0 %v912, 64
        %v937 = vpop.permute.xlu0 %936
        %938 = vrot.lane.b32.xlu0 %v915, 64
        %v939 = vpop.permute.xlu0 %938
        %v940 = vsel %vm503, %v917, %v864
        %v941 = vsel %vm503, %v919, %v865
        %v942 = vsel %vm503, %v921, %v866
        %v943 = vsel %vm503, %v923, %v867
        %v944 = vsel %vm503, %v925, %v868
        %v945 = vsel %vm503, %v927, %v869
        %v946 = vsel %vm503, %v929, %v870
        %v947 = vsel %vm503, %v931, %v871
        %v948 = vsel %vm503, %v933, %v872
        %v949 = vsel %vm503, %v935, %v873
        %v950 = vsel %vm503, %v937, %v874
        %v951 = vsel %vm503, %v939, %v875
        %v952 = vsel %vm879, 1, 0
        %vm953 = vcmp.eq.s32.totalorder %v952, 1
        %966 = vrot.lane.b32.xlu0 %v940, 66
        %v967 = vpop.permute.xlu0 %966
        %968 = vrot.lane.b32.xlu0 %v941, 66
        %v969 = vpop.permute.xlu0 %968
        %970 = vrot.lane.b32.xlu0 %v942, 66
        %v971 = vpop.permute.xlu0 %970
        %972 = vrot.lane.b32.xlu0 %v943, 66
        %v973 = vpop.permute.xlu0 %972
        %974 = vrot.lane.b32.xlu0 %v944, 66
        %v975 = vpop.permute.xlu0 %974
        %976 = vrot.lane.b32.xlu0 %v945, 66
        %v977 = vpop.permute.xlu0 %976
        %978 = vrot.lane.b32.xlu0 %v946, 66
        %v979 = vpop.permute.xlu0 %978
        %980 = vrot.lane.b32.xlu0 %v947, 66
        %v981 = vpop.permute.xlu0 %980
        %982 = vrot.lane.b32.xlu0 %v948, 66
        %v983 = vpop.permute.xlu0 %982
        %984 = vrot.lane.b32.xlu0 %v949, 66
        %v985 = vpop.permute.xlu0 %984
        %986 = vrot.lane.b32.xlu0 %v950, 66
        %v987 = vpop.permute.xlu0 %986
        %988 = vrot.lane.b32.xlu0 %v951, 66
        %v989 = vpop.permute.xlu0 %988
        %v1002 = vsel %vm953, %v967, %v864
        %v1003 = vsel %vm953, %v969, %v865
        %v1004 = vsel %vm953, %v971, %v866
        %v1005 = vsel %vm953, %v973, %v867
        %v1006 = vsel %vm953, %v975, %v868
        %v1007 = vsel %vm953, %v977, %v869
        %v1008 = vsel %vm953, %v979, %v870
        %v1009 = vsel %vm953, %v981, %v871
        %v1010 = vsel %vm953, %v983, %v872
        %v1011 = vsel %vm953, %v985, %v873
        %v1012 = vsel %vm953, %v987, %v874
        %v1013 = vsel %vm953, %v989, %v875
        %v1014 = vsel %vm878, 1, 0
        %vm1015 = vcmp.eq.s32.totalorder %v1014, 1
        %1016 = vrot.lane.b32.xlu0 %v940, 126
        %v1017 = vpop.permute.xlu0 %1016
        %1018 = vrot.lane.b32.xlu0 %v941, 126
        %v1019 = vpop.permute.xlu0 %1018
        %1020 = vrot.lane.b32.xlu0 %v942, 126
        %v1021 = vpop.permute.xlu0 %1020
        %1022 = vrot.lane.b32.xlu0 %v943, 126
        %v1023 = vpop.permute.xlu0 %1022
        %1024 = vrot.lane.b32.xlu0 %v944, 126
        %v1025 = vpop.permute.xlu0 %1024
        %1026 = vrot.lane.b32.xlu0 %v945, 126
        %v1027 = vpop.permute.xlu0 %1026
        %1028 = vrot.lane.b32.xlu0 %v946, 126
        %v1029 = vpop.permute.xlu0 %1028
        %1030 = vrot.lane.b32.xlu0 %v947, 126
        %v1031 = vpop.permute.xlu0 %1030
        %1032 = vrot.lane.b32.xlu0 %v948, 126
        %v1033 = vpop.permute.xlu0 %1032
        %1034 = vrot.lane.b32.xlu0 %v949, 126
        %v1035 = vpop.permute.xlu0 %1034
        %1036 = vrot.lane.b32.xlu0 %v950, 126
        %v1037 = vpop.permute.xlu0 %1036
        %1038 = vrot.lane.b32.xlu0 %v951, 126
        %v1039 = vpop.permute.xlu0 %1038
        %v1052 = vsel %vm1015, %v1017, %v1002
        %v1053 = vsel %vm1015, %v1019, %v1003
        %v1054 = vsel %vm1015, %v1021, %v1004
        %v1055 = vsel %vm1015, %v1023, %v1005
        %v1056 = vsel %vm1015, %v1025, %v1006
        %v1057 = vsel %vm1015, %v1027, %v1007
        %v1058 = vsel %vm1015, %v1029, %v1008
        %v1059 = vsel %vm1015, %v1031, %v1009
        %v1060 = vsel %vm1015, %v1033, %v1010
        %v1061 = vsel %vm1015, %v1035, %v1011
        %v1062 = vsel %vm1015, %v1037, %v1012
        %v1063 = vsel %vm1015, %v1039, %v1013
        %v1064 = vand.u32 %v498, 3
        %vm1065 = vcmp.eq.s32.totalorder %v1064, 1
        %vm1066 = vcmp.eq.s32.totalorder %v1064, 2
        %1067 = vrot.lane.b32.xlu0 %v1052, 64
        %v1068 = vpop.permute.xlu0 %1067
        %v1069 = vsel %vm503, %v1068, %v1052
        %1070 = vrot.lane.b32.xlu0 %v1053, 64
        %v1071 = vpop.permute.xlu0 %1070
        %v1072 = vsel %vm503, %v1071, %v1053
        %1073 = vrot.lane.b32.xlu0 %v1054, 64
        %v1074 = vpop.permute.xlu0 %1073
        %v1075 = vsel %vm503, %v1074, %v1054
        %1076 = vrot.lane.b32.xlu0 %v1055, 64
        %v1077 = vpop.permute.xlu0 %1076
        %v1078 = vsel %vm503, %v1077, %v1055
        %1079 = vrot.lane.b32.xlu0 %v1056, 64
        %v1080 = vpop.permute.xlu0 %1079
        %v1081 = vsel %vm503, %v1080, %v1056
        %1082 = vrot.lane.b32.xlu0 %v1057, 64
        %v1083 = vpop.permute.xlu0 %1082
        %v1084 = vsel %vm503, %v1083, %v1057
        %1085 = vrot.lane.b32.xlu0 %v1058, 64
        %v1086 = vpop.permute.xlu0 %1085
        %v1087 = vsel %vm503, %v1086, %v1058
        %1088 = vrot.lane.b32.xlu0 %v1059, 64
        %v1089 = vpop.permute.xlu0 %1088
        %v1090 = vsel %vm503, %v1089, %v1059
        %1091 = vrot.lane.b32.xlu0 %v1060, 64
        %v1092 = vpop.permute.xlu0 %1091
        %v1093 = vsel %vm503, %v1092, %v1060
        %1094 = vrot.lane.b32.xlu0 %v1061, 64
        %v1095 = vpop.permute.xlu0 %1094
        %v1096 = vsel %vm503, %v1095, %v1061
        %1097 = vrot.lane.b32.xlu0 %v1062, 64
        %v1098 = vpop.permute.xlu0 %1097
        %v1099 = vsel %vm503, %v1098, %v1062
        %1100 = vrot.lane.b32.xlu0 %v1063, 64
        %v1101 = vpop.permute.xlu0 %1100
        %v1102 = vsel %vm503, %v1101, %v1063
        %1103 = vrot.lane.b32.xlu0 %v1069, 64
        %v1104 = vpop.permute.xlu0 %1103
        %1105 = vrot.lane.b32.xlu0 %v1072, 64
        %v1106 = vpop.permute.xlu0 %1105
        %1107 = vrot.lane.b32.xlu0 %v1075, 64
        %v1108 = vpop.permute.xlu0 %1107
        %1109 = vrot.lane.b32.xlu0 %v1078, 64
        %v1110 = vpop.permute.xlu0 %1109
        %1111 = vrot.lane.b32.xlu0 %v1081, 64
        %v1112 = vpop.permute.xlu0 %1111
        %1113 = vrot.lane.b32.xlu0 %v1084, 64
        %v1114 = vpop.permute.xlu0 %1113
        %1115 = vrot.lane.b32.xlu0 %v1087, 64
        %v1116 = vpop.permute.xlu0 %1115
        %1117 = vrot.lane.b32.xlu0 %v1090, 64
        %v1118 = vpop.permute.xlu0 %1117
        %1119 = vrot.lane.b32.xlu0 %v1093, 64
        %v1120 = vpop.permute.xlu0 %1119
        %1121 = vrot.lane.b32.xlu0 %v1096, 64
        %v1122 = vpop.permute.xlu0 %1121
        %1123 = vrot.lane.b32.xlu0 %v1099, 64
        %v1124 = vpop.permute.xlu0 %1123
        %1125 = vrot.lane.b32.xlu0 %v1102, 64
        %v1126 = vpop.permute.xlu0 %1125
        %v1127 = vsel %vm503, %v1104, %v1052
        %v1128 = vsel %vm503, %v1106, %v1053
        %v1129 = vsel %vm503, %v1108, %v1054
        %v1130 = vsel %vm503, %v1110, %v1055
        %v1131 = vsel %vm503, %v1112, %v1056
        %v1132 = vsel %vm503, %v1114, %v1057
        %v1133 = vsel %vm503, %v1116, %v1058
        %v1134 = vsel %vm503, %v1118, %v1059
        %v1135 = vsel %vm503, %v1120, %v1060
        %v1136 = vsel %vm503, %v1122, %v1061
        %v1137 = vsel %vm503, %v1124, %v1062
        %v1138 = vsel %vm503, %v1126, %v1063
        %v1139 = vsel %vm1066, 1, 0
        %vm1140 = vcmp.eq.s32.totalorder %v1139, 1
        %1153 = vrot.lane.b32.xlu0 %v1127, 65
        %v1154 = vpop.permute.xlu0 %1153
        %1155 = vrot.lane.b32.xlu0 %v1128, 65
        %v1156 = vpop.permute.xlu0 %1155
        %1157 = vrot.lane.b32.xlu0 %v1129, 65
        %v1158 = vpop.permute.xlu0 %1157
        %1159 = vrot.lane.b32.xlu0 %v1130, 65
        %v1160 = vpop.permute.xlu0 %1159
        %1161 = vrot.lane.b32.xlu0 %v1131, 65
        %v1162 = vpop.permute.xlu0 %1161
        %1163 = vrot.lane.b32.xlu0 %v1132, 65
        %v1164 = vpop.permute.xlu0 %1163
        %1165 = vrot.lane.b32.xlu0 %v1133, 65
        %v1166 = vpop.permute.xlu0 %1165
        %1167 = vrot.lane.b32.xlu0 %v1134, 65
        %v1168 = vpop.permute.xlu0 %1167
        %1169 = vrot.lane.b32.xlu0 %v1135, 65
        %v1170 = vpop.permute.xlu0 %1169
        %1171 = vrot.lane.b32.xlu0 %v1136, 65
        %v1172 = vpop.permute.xlu0 %1171
        %1173 = vrot.lane.b32.xlu0 %v1137, 65
        %v1174 = vpop.permute.xlu0 %1173
        %1175 = vrot.lane.b32.xlu0 %v1138, 65
        %v1176 = vpop.permute.xlu0 %1175
        %v1189 = vsel %vm1140, %v1154, %v1052
        %v1190 = vsel %vm1140, %v1156, %v1053
        %v1191 = vsel %vm1140, %v1158, %v1054
        %v1192 = vsel %vm1140, %v1160, %v1055
        %v1193 = vsel %vm1140, %v1162, %v1056
        %v1194 = vsel %vm1140, %v1164, %v1057
        %v1195 = vsel %vm1140, %v1166, %v1058
        %v1196 = vsel %vm1140, %v1168, %v1059
        %v1197 = vsel %vm1140, %v1170, %v1060
        %v1198 = vsel %vm1140, %v1172, %v1061
        %v1199 = vsel %vm1140, %v1174, %v1062
        %v1200 = vsel %vm1140, %v1176, %v1063
        %v1201 = vsel %vm1065, 1, 0
        %vm1202 = vcmp.eq.s32.totalorder %v1201, 1
        %1203 = vrot.lane.b32.xlu0 %v1127, 127
        %v1204 = vpop.permute.xlu0 %1203
        %1205 = vrot.lane.b32.xlu0 %v1128, 127
        %v1206 = vpop.permute.xlu0 %1205
        %1207 = vrot.lane.b32.xlu0 %v1129, 127
        %v1208 = vpop.permute.xlu0 %1207
        %1209 = vrot.lane.b32.xlu0 %v1130, 127
        %v1210 = vpop.permute.xlu0 %1209
        %1211 = vrot.lane.b32.xlu0 %v1131, 127
        %v1212 = vpop.permute.xlu0 %1211
        %1213 = vrot.lane.b32.xlu0 %v1132, 127
        %v1214 = vpop.permute.xlu0 %1213
        %1215 = vrot.lane.b32.xlu0 %v1133, 127
        %v1216 = vpop.permute.xlu0 %1215
        %1217 = vrot.lane.b32.xlu0 %v1134, 127
        %v1218 = vpop.permute.xlu0 %1217
        %1219 = vrot.lane.b32.xlu0 %v1135, 127
        %v1220 = vpop.permute.xlu0 %1219
        %1221 = vrot.lane.b32.xlu0 %v1136, 127
        %v1222 = vpop.permute.xlu0 %1221
        %1223 = vrot.lane.b32.xlu0 %v1137, 127
        %v1224 = vpop.permute.xlu0 %1223
        %1225 = vrot.lane.b32.xlu0 %v1138, 127
        %v1226 = vpop.permute.xlu0 %1225
        %v1239 = vsel %vm1202, %v1204, %v1189
        %v1240 = vsel %vm1202, %v1206, %v1190
        %v1241 = vsel %vm1202, %v1208, %v1191
        %v1242 = vsel %vm1202, %v1210, %v1192
        %v1243 = vsel %vm1202, %v1212, %v1193
        %v1244 = vsel %vm1202, %v1214, %v1194
        %v1245 = vsel %vm1202, %v1216, %v1195
        %v1246 = vsel %vm1202, %v1218, %v1196
        %v1247 = vsel %vm1202, %v1220, %v1197
        %v1248 = vsel %vm1202, %v1222, %v1198
        %v1249 = vsel %vm1202, %v1224, %v1199
        %v1250 = vsel %vm1202, %v1226, %v1200
        %vm1251 = vcmask 523264
        %1252 = vst.msk [vmem:[%s165] sm:$0xff] %vm1251, %v1239
        %1253 = vst.msk [vmem:[%s165 + $0x8] sm:$0xff] %vm1251, %v1240
        %1254 = vst.msk [vmem:[%s165 + $0x10] sm:$0xff] %vm1251, %v1241
        %1255 = vst.msk [vmem:[%s165 + $0x18] sm:$0xff] %vm1251, %v1242
        %1256 = vst.msk [vmem:[%s165 + $0x20] sm:$0xff] %vm1251, %v1243
        %1257 = vst.msk [vmem:[%s165 + $0x28] sm:$0xff] %vm1251, %v1244
        %1258 = vst.msk [vmem:[%s165 + $0x30] sm:$0xff] %vm1251, %v1245
        %1259 = vst.msk [vmem:[%s165 + $0x38] sm:$0xff] %vm1251, %v1246
        %1260 = vst.msk [vmem:[%s165 + $0x40] sm:$0xff] %vm1251, %v1247
        %1261 = vst.msk [vmem:[%s165 + $0x48] sm:$0xff] %vm1251, %v1248
        %1262 = vst.msk [vmem:[%s165 + $0x50] sm:$0xff] %vm1251, %v1249
        %1263 = vst.msk [vmem:[%s165 + $0x58] sm:$0xff] %vm1251, %v1250
        %s1264 = smul.u32 12, %s20
        %p1265 = scmp.lt.s32.totalorder %s19, 1
        %s1266 = scalar_select %p1265, %s19, 1
        %p1267 = scmp.lt.s32.totalorder %s1264, 11
        %s1268 = scalar_select %p1267, %s1264, 11
        %s1269 = smul.addr %s1266, 12
        %s1270 = sadd.s32 %s1268, %s1269
        %s1271 = smul.addr %s1270, 8
        %s1272 = scalar_lea.vmem %s1, %s1271
        // Predicated region
        $region29: #{_iwt_impl.1} parent=23 // pred_check
          %p1273 = pneg %p75
        $region30: #{_iwt_impl.1} parent=23 // pred_check_branch
          %1275 = sbr.rel (%p1273) target = $region32
        $region31: #{_iwt_impl.1} parent=23 // pred_region
          %s1276 = smul.u32 12, %s20
        $region32: #{_iwt_impl.1} parent=23 // pred_fallthru
          _
      $region24: #{_iwt_impl.1} parent=5 // pred_fallthru
        _
      %p1277 = scmp.le.s32.totalorder 2, %s10
      // Predicated region
      $region33: #{_iwt_impl.1} parent=5 // pred_check
        %p1278 = pneg %p1277
      $region34: #{_iwt_impl.1} parent=5 // pred_check_branch
        %1280 = sbr.rel (%p1278) target = $region36
      $region35: #{_iwt_impl.1} parent=5 // pred_region
        %s1281 = ssub.s32 %s10, 2
        // Predicated region
        $region37: #{_iwt_impl.1} parent=35 // pred_check
          %p1282 = pneg %p81
        $region38: #{_iwt_impl.1} parent=35 // pred_check_branch
          %1284 = sbr.rel (%p1282) target = $region40
        $region39: #{_iwt_impl.1} parent=35 // pred_region
          %s1285 = smul.u32 12, %s22
          %p1286 = scmp.lt.s32.totalorder %s21, 1
          %s1287 = scalar_select %p1286, %s21, 1
          %p1288 = scmp.lt.s32.totalorder %s1285, 11
          %s1289 = scalar_select %p1288, %s1285, 11
          %s1290 = smul.addr %s1287, 12
          %s1291 = sadd.s32 %s1289, %s1290
          %s1292 = smul.addr %s1291, 8
          %s1293 = scalar_lea.vmem %s1, %s1292
        $region40: #{_iwt_impl.1} parent=35 // pred_fallthru
          _
      $region36: #{_iwt_impl.1} parent=5 // pred_fallthru
        _
    $region6: #{_iwt_impl.1} parent=1 // loop_footer
      %s14 = sadd.s32 1, %s10
    $region7: #{_iwt_impl.1} parent=1 // loop_footer_branch
      %9 = sbr.rel target = $region3
    $region8: #{_iwt_impl.1} parent=1 // loop_exit
      _
    %1294 = vsyncpa [#allocation3], 1
    %s1295 = scalar_lea.sflag [#allocation3], 1
    %1296 = vsyncpa %s1295, 1

</llo_original>
